<compile_context>
chip_gen: v7x
topology: tpu7x:2x2x1
jax: 0.10.0
libtpu: 0.0.40
codegen_flags: <defaults>
</compile_context>

<pallas_src>
import functools

import jax
import jax.numpy as jnp
from jax.experimental import pallas as pl
from jax.experimental.pallas import tpu as pltpu


def _round_up(n, m):
    return ((n + m - 1) // m) * m


def _fc_affine_kernel(x_ref, wb_ref, y_ref, *, nn_in):
    """Fused affine layer: y = x @ W + b.

    wb_ref layout: rows [0, nn_in) hold W (nn_in, nn_out); row nn_in holds b.
    """
    x = x_ref[...]                                  # (tb, nn_in)
    w = wb_ref[0:nn_in, :]                          # (nn_in, nn_out)
    b = wb_ref[nn_in:nn_in + 1, :]                  # (1, nn_out)
    y = jnp.dot(x, w, preferred_element_type=jnp.float32) + b
    y_ref[...] = y.astype(y_ref.dtype)              # narrow (tb, nn_out) store


def _fc_xy_2l_impl(x, params, *, block_batch=1024):
    """Reproduces FC_xy_2l.forward: returns (x, y) with y = Lin3(Lin2(Lin1(x)))."""
    w1, b1, w2, b2, w3, b3 = params
    nn_in = w1.shape[0]
    nn_out = w3.shape[1]

    # --- Fold the activation-free chain into one affine map (traced once under jit).
    w = w1 @ w2 @ w3                                 # (nn_in, nn_out)
    b = (b1 @ w2 + b2) @ w3 + b3                     # (1, nn_out)

    # --- Pack W and b into one narrow, sublane-aligned param buffer.
    rows = _round_up(nn_in + 1, 8)                   # W rows + bias row, 8-sublane aligned
    wb = jnp.zeros((rows, nn_out), jnp.float32)
    wb = wb.at[:nn_in, :].set(w)
    wb = wb.at[nn_in, :].set(b[0])

    # --- Batch tiling: up to block_batch rows per grid step (multiple of 8 sublanes).
    batch = x.shape[0]
    rows8 = _round_up(max(batch, 1), 8)
    tb = min(_round_up(block_batch, 8), rows8)
    # v7x: keep >=2 grid steps when possible so both TensorCores get work
    # (no-op on single-TC v5e/v6e).
    if pl.cdiv(rows8, tb) < 2 and rows8 > 8:
        tb = max(8, _round_up(pl.cdiv(rows8, 2), 8))

    grid = (pl.cdiv(batch, tb),)
    kernel = functools.partial(_fc_affine_kernel, nn_in=nn_in)

    itemsize = jnp.dtype(jnp.float32).itemsize
    cost = pl.CostEstimate(
        flops=2 * batch * nn_in * nn_out,
        transcendentals=0,
        bytes_accessed=(batch * nn_in + rows * nn_out + batch * nn_out) * itemsize,
    )

    y = pl.pallas_call(
        kernel,
        out_shape=jax.ShapeDtypeStruct((batch, nn_out), x.dtype),
        grid_spec=pltpu.PrefetchScalarGridSpec(
            num_scalar_prefetch=0,
            grid=grid,
            in_specs=[
                # x streamed per batch tile (last dim == full array dim).
                pl.BlockSpec((tb, nn_in), lambda i: (i, 0)),
                # packed params: full block, constant index_map -> VMEM-resident.
                pl.BlockSpec((rows, nn_out), lambda i: (0, 0)),
            ],
            # Narrow, ragged-safe output: nn_out == full last dim, rows masked on
            # the partial final block.
            out_specs=pl.BlockSpec((tb, nn_out), lambda i: (i, 0)),
        ),
        compiler_params=pltpu.CompilerParams(
            dimension_semantics=("parallel",),        # v7x shards batch steps across TCs
        ),
        cost_estimate=cost,
    )(x, wb)

    return (x, y)


# One jit around the whole thing: fold + packing + kernel are a single dispatch.
fc_xy_2l = jax.jit(_fc_xy_2l_impl, static_argnames=("block_batch",))


def init_params(key, nn_in, nn_out):
    """Deterministic init mimicking nn.Linear default (uniform(-1/sqrt(fan_in), 1/sqrt(fan_in)))."""
    dims = [(nn_in, 64), (64, 32), (32, nn_out)]
    params = []
    for (fan_in, fan_out) in dims:
        key, kw, kb = jax.random.split(key, 3)
        bound = 1.0 / (fan_in ** 0.5)
        w = jax.random.uniform(kw, (fan_in, fan_out), jnp.float32, -bound, bound)
        b = jax.random.uniform(kb, (1, fan_out), jnp.float32, -bound, bound)
        params += [w, b]
    return tuple(params)


def _reference(x, params):
    w1, b1, w2, b2, w3, b3 = params
    return ((x @ w1 + b1) @ w2 + b2) @ w3 + b3


if __name__ == "__main__":
    nn_in, nn_out = 16, 8

    key = jax.random.PRNGKey(0)
    key, kx_small, kx_large = jax.random.split(key, 3)
    params = init_params(key, nn_in, nn_out)

    # Small batch (4 rows): single ragged block, exercises masked partial-block path.
    x_small = jax.random.normal(kx_small, (4, nn_in), jnp.float32)
    x_out, y_out = fc_xy_2l(x_small, params)
    jax.block_until_ready((x_out, y_out))
    y_ref = _reference(x_small, params)
    assert y_out.shape == (4, nn_out)
    assert jnp.allclose(y_out, y_ref, atol=1e-4, rtol=1e-4), "small-batch mismatch"
    assert jnp.array_equal(x_out, x_small)

    # Larger non-multiple-of-tile batch: multi-step grid + ragged final block,
    # guards the "no padded-batch copy" change.
    x_large = jax.random.normal(kx_large, (300, nn_in), jnp.float32)
    x_out2, y_out2 = fc_xy_2l(x_large, params)
    jax.block_until_ready((x_out2, y_out2))
    y_ref2 = _reference(x_large, params)
    assert y_out2.shape == (300, nn_out)
    assert jnp.allclose(y_out2, y_ref2, atol=1e-4, rtol=1e-4), "large-batch mismatch"
    assert jnp.array_equal(x_out2, x_large)

    print("KERNEL_OK")
</pallas_src>

<mosaic_0001>
module attributes {stable_mosaic.version = 11 : i64} {
  func.func @_fc_affine_kernel(%arg0: i32, %arg1: memref<8x16xf32, #tpu.memory_space<vmem>>, %arg2: memref<24x8xf32, #tpu.memory_space<vmem>>, %arg3: memref<8x8xf32, #tpu.memory_space<vmem>>) attributes {dimension_semantics = [#tpu.dimension_semantics<parallel>], iteration_bounds = array<i64: 1>, scalar_prefetch = 0 : i64, scratch_operands = 0 : i64, tpu.core_type = #tpu.core_type<tc>, window_params = [{transform_indices = @transform_0, window_bounds = array<i64: 8, 16>}, {pipeline_mode = #tpu.pipeline_mode<synchronous>, transform_indices = @transform_1, window_bounds = array<i64: 24, 8>}, {transform_indices = @transform_2, window_bounds = array<i64: 8, 8>}]} {
    %c0 = arith.constant 0 : index
    %c0_0 = arith.constant 0 : index
    %0 = vector.load %arg1[%c0, %c0_0] : memref<8x16xf32, #tpu.memory_space<vmem>>, vector<8x16xf32>
    %c0_1 = arith.constant 0 : index
    %c0_2 = arith.constant 0 : index
    %1 = vector.load %arg2[%c0_1, %c0_2] : memref<24x8xf32, #tpu.memory_space<vmem>>, vector<16x8xf32>
    %c16 = arith.constant 16 : index
    %c0_3 = arith.constant 0 : index
    %2 = vector.load %arg2[%c16, %c0_3] : memref<24x8xf32, #tpu.memory_space<vmem>>, vector<1x8xf32>
    %cst = arith.constant dense<0.000000e+00> : vector<8x8xf32>
    %3 = tpu.matmul %0, %1, %cst {dimension_numbers = #tpu.dot_dimension_numbers<[1], [0], [0], [1], [0, 0, 1, 1], [], []>} : vector<8x16xf32>, vector<16x8xf32>, vector<8x8xf32> -> vector<8x8xf32>
    %4 = vector.broadcast %2 : vector<1x8xf32> to vector<8x8xf32>
    %5 = arith.addf %3, %4 : vector<8x8xf32>
    %c0_4 = arith.constant 0 : index
    %c0_5 = arith.constant 0 : index
    %6 = vector.load %arg3[%c0_4, %c0_5] : memref<8x8xf32, #tpu.memory_space<vmem>>, vector<8x8xf32>
    tpu.vector_store %arg3[%c0_4, %c0_5], %5 {strides = array<i32>} : memref<8x8xf32, #tpu.memory_space<vmem>>, vector<8x8xf32>,
    return
  }
  func.func @transform_0(%arg0: i32) -> (i32, i32) {
    %c0_i32 = arith.constant 0 : i32
    %c0_i32_0 = arith.constant 0 : i32
    return %arg0, %c0_i32 : i32, i32
  }
  func.func @transform_1(%arg0: i32) -> (i32, i32) {
    %c0_i32 = arith.constant 0 : i32
    %c0_i32_0 = arith.constant 0 : i32
    %c0_i32_1 = arith.constant 0 : i32
    return %c0_i32, %c0_i32_0 : i32, i32
  }
  func.func @transform_2(%arg0: i32) -> (i32, i32) {
    %c0_i32 = arith.constant 0 : i32
    %c0_i32_0 = arith.constant 0 : i32
    return %arg0, %c0_i32 : i32, i32
  }
}

</mosaic_0001>

<llo_original>
// kernel: _fc_xy_2l_impl.1
$region0: #{_fc_xy_2l_impl.1}
  #allocation0 [shape = 'u32[]', space=smem, size = 0x4, offset = 0x4, fixed_abs, tag = 'smem constant byte address 0x4 - core index']
  #allocation1 [shape = 'u32[144,128]{1,0:T(1,128)}', space=vmem, size = 0x12000, scoped, tag = 'internal scratch']
  %s0 = inlined_call_operand.vmem [shape: f32[4,16], index: 0, kind: input, shape index: {}]
  %s1 = inlined_call_operand.vmem [shape: f32[24,8], index: 1, kind: input, shape index: {}]
  %s2 = inlined_call_operand.hbm [shape: f32[4,8], index: 2, kind: output, shape index: {}]
  %s3 = sld [smem:[#allocation0]]
  $region18: #{_fc_xy_2l_impl.1} parent=0
    _
  %s5 = ssub.s32 1, %s3
  %s6 = scalar_select 0, %s5, %s3
  $region1: #{_fc_xy_2l_impl.1} parent=0
    #allocation2 [shape = 'u8[4096]{0}', space=vmem, size = 0x1000, scoped, tag = 'output window, operand 0, single buffered']
    #allocation3 [shape = 's32[1]{0}', space=sflag, size = 0x4, scoped, tag = 'scoped memory for _fc_xy_2l_impl.1']
    %7 = vsyncpa [#allocation3], 0
    // Predicated region
    $region2: #{_fc_xy_2l_impl.1} parent=1 // pred_check
      _
    $region3: #{_fc_xy_2l_impl.1} parent=1 // pred_check_branch
      %9 = sbr.rel (0) target = $region5
    $region4: #{_fc_xy_2l_impl.1} parent=1 // pred_region
      _
    $region5: #{_fc_xy_2l_impl.1} parent=1 // pred_fallthru
      _
    // Predicated region
    $region6: #{_fc_xy_2l_impl.1} parent=1 // pred_check
      _
    $region7: #{_fc_xy_2l_impl.1} parent=1 // pred_check_branch
      %11 = sbr.rel (0) target = $region9
    $region8: #{_fc_xy_2l_impl.1} parent=1 // pred_region
      _
    $region9: #{_fc_xy_2l_impl.1} parent=1 // pred_fallthru
      _
    %v12 = vld [vmem:[%s0] sm:$0xff]
    %v13 = vld [vmem:[%s1] sm:$0xff]
    %v14 = vld [vmem:[%s1 + $0x8] sm:$0xff]
    %v15 = vld [vmem:[%s1 + $0x10] sm:$0x1]
    %v16 = vlaneseq
    %v17 = vshrl.u32 %v16, 7
    %v18 = vsub.s32 0, %v17
    %v19 = vrot.slane %v15, %v18
    %vm20 = vcmask 130048
    %v22 = vsel %vm20, %v12, 0
    %24 = vmatprep.subr.mxu0 0.0
    %25 = vmatpush1.msra.mxu0 %v13
    %26 = vmatprep.subr.mxu0 0.0
    %27 = vmatpush1.msra.mxu0 %v14
    %28 = vmatprep.subr.mxu0 0.0
    %29 = vmatpush1.msra.mxu0 0.0
    %30 = vmatprep.subr.mxu0 0.0
    %31 = vmatpush1.msra.mxu0 0.0
    %32 = vmatprep.subr.mxu0 0.0
    %33 = vmatpush1.msra.mxu0 0.0
    %34 = vmatprep.subr.mxu0 0.0
    %35 = vmatpush1.msra.mxu0 0.0
    %36 = vmatprep.subr.mxu0 0.0
    %37 = vmatpush1.msra.mxu0 0.0
    %38 = vmatprep.subr.mxu0 0.0
    %39 = vmatpush1.msra.mxu0 0.0
    %40 = vmatprep.subr.mxu0 0.0
    %41 = vmatpush1.msra.mxu0 0.0
    %42 = vmatprep.subr.mxu0 0.0
    %43 = vmatpush1.msra.mxu0 0.0
    %44 = vmatprep.subr.mxu0 0.0
    %45 = vmatpush1.msra.mxu0 0.0
    %46 = vmatprep.subr.mxu0 0.0
    %47 = vmatpush1.msra.mxu0 0.0
    %48 = vmatprep.subr.mxu0 0.0
    %49 = vmatpush1.msra.mxu0 0.0
    %50 = vmatprep.subr.mxu0 0.0
    %51 = vmatpush1.msra.mxu0 0.0
    %52 = vmatprep.subr.mxu0 0.0
    %53 = vmatpush1.msra.mxu0 0.0
    %54 = vmatprep.subr.mxu0 0.0
    %55 = vmatpush1.msra.mxu0 0.0
    %56 = vmatprep.subr.mxu0 0.0
    %57 = vmatpush1.msra.mxu0 0.0
    %58 = vmatprep.subr.mxu0 0.0
    %59 = vmatpush1.msra.mxu0 0.0
    %60 = vmatprep.subr.mxu0 0.0
    %61 = vmatpush1.msra.mxu0 0.0
    %62 = vmatprep.subr.mxu0 0.0
    %63 = vmatpush1.msra.mxu0 0.0
    %64 = vmatprep.subr.mxu0 0.0
    %65 = vmatpush1.msra.mxu0 0.0
    %66 = vmatprep.subr.mxu0 0.0
    %67 = vmatpush1.msra.mxu0 0.0
    %68 = vmatprep.subr.mxu0 0.0
    %69 = vmatpush1.msra.mxu0 0.0
    %70 = vmatprep.subr.mxu0 0.0
    %71 = vmatpush1.msra.mxu0 0.0
    %72 = vmatprep.subr.mxu0 0.0
    %73 = vmatpush1.msra.mxu0 0.0
    %74 = vmatprep.subr.mxu0 0.0
    %75 = vmatpush1.msra.mxu0 0.0
    %76 = vmatprep.subr.mxu0 0.0
    %77 = vmatpush1.msra.mxu0 0.0
    %78 = vmatprep.subr.mxu0 0.0
    %79 = vmatpush1.msra.mxu0 0.0
    %80 = vmatprep.subr.mxu0 0.0
    %81 = vmatpush1.msra.mxu0 0.0
    %82 = vmatprep.subr.mxu0 0.0
    %83 = vmatpush1.msra.mxu0 0.0
    %84 = vmatprep.subr.mxu0 0.0
    %85 = vmatpush1.msra.mxu0 0.0
    %86 = vmatprep.subr.mxu0 0.0
    %87 = vmatpush1.msra.mxu0 0.0
    %88 = vmatprep.mubr.f32.mxu0 0.0
    %89 = vmatmul.mubr.f32.gmra.mrb[0].mxu0 %v22
    %v90 = vpop.f32.mrb[0].mxu0
    %v91 = vadd.f32 %v19, %v90
    %v92 = vpop.f32.mrb[0].mxu0
    %93 = vdwg.mxu0
    %vm94 = vcmask 64512
    %95 = vst.msk [vmem:[#allocation2] sm:$0xff] %vm94, %v91
    // Predicated region
    $region10: #{_fc_xy_2l_impl.1} parent=1 // pred_check
      _
    $region11: #{_fc_xy_2l_impl.1} parent=1 // pred_check_branch
      %97 = sbr.rel (0) target = $region13
    $region12: #{_fc_xy_2l_impl.1} parent=1 // pred_region
      %s99 = ssub.s32 128, 64
      %100 = vsyncadd [#allocation3], %s99
      %s101 = sshll.u32 [#allocation2], 4
      %s102 = int_to_ptr.vmem [resolvable:$true] %s101
      %107 = dma.vmem_to_hbm [thread:$0]  %s102, 64, %s2, [#allocation3], 64, 64, 4
    $region13: #{_fc_xy_2l_impl.1} parent=1 // pred_fallthru
      _
    // Predicated region
    $region14: #{_fc_xy_2l_impl.1} parent=1 // pred_check
      _
    $region15: #{_fc_xy_2l_impl.1} parent=1 // pred_check_branch
      %109 = sbr.rel (0) target = $region17
    $region16: #{_fc_xy_2l_impl.1} parent=1 // pred_region
      %110 = dma.done [#allocation3], 128
    $region17: #{_fc_xy_2l_impl.1} parent=1 // pred_fallthru
      _
    %111 = vsyncpa [#allocation3], 1

</llo_original>
